<compile_context>
chip_gen: v7x
topology: tpu7x:2x2x1
jax: 0.10.0
libtpu: 0.0.40
codegen_flags: <defaults>
</compile_context>

<pallas_src>
import functools

import jax
import jax.numpy as jnp
from jax import lax
from jax.experimental import pallas as pl
from jax.experimental.pallas import tpu as pltpu

HIDDEN = 128  # hidden width of the MLP (also the packed-weight lane width)


def _round_up(x, m):
    return ((x + m - 1) // m) * m


def actor_kernel(x_ref, w_ref, b_ref, out_ref, *, act_dim, in_dim):
    """Fused 4-layer MLP + masked softmax on one [TB, in_dim] batch tile.

    x_ref:   (TB, in_dim)   f32   obs tile (in_dim = state_dim rounded to 8)
    w_ref:   (4, 128, 128)  bf16  stacked weights (w1 rows / w4 cols zero-padded)
    b_ref:   (4, 1, 128)    f32   stacked biases (padded lanes are zero)
    out_ref: (TB, act_dim)  f32   probabilities
    """
    # Cast to bf16 in-kernel (lands on VPU slack, saves a wrapper HBM pass).
    h = x_ref[...].astype(jnp.bfloat16)

    # Layer 1: only the first in_dim rows of the packed w1 are live.
    w1 = w_ref[0][:in_dim, :]
    z = jnp.dot(h, w1, preferred_element_type=jnp.float32) + b_ref[0]
    h = jnp.maximum(z, 0.0).astype(jnp.bfloat16)

    # Layers 2-3: Linear + ReLU (bf16 matmul operands, f32 accumulate/bias/ReLU).
    for l in (1, 2):
        z = jnp.dot(h, w_ref[l], preferred_element_type=jnp.float32) + b_ref[l]
        h = jnp.maximum(z, 0.0).astype(jnp.bfloat16)

    # Layer 4: logits in f32, lane-padded to 128 (padded w4 cols / bias are 0).
    logits = jnp.dot(h, w_ref[3], preferred_element_type=jnp.float32) + b_ref[3]

    # Mask padded action lanes so they don't pollute the softmax (f32: exp -> 0).
    lane = lax.broadcasted_iota(jnp.int32, logits.shape, dimension=1)
    logits = jnp.where(lane < act_dim, logits, jnp.float32(-1e30))

    # Softmax along the action (lane) axis; exact divide so rows sum to 1.
    m = jnp.max(logits, axis=1, keepdims=True)
    e = jnp.exp(logits - m)
    denom = jnp.sum(e, axis=1, keepdims=True)
    probs = e / denom

    # Narrow (act_dim-lane) store: tiny DMA writeback instead of a 128-lane slab.
    out_ref[...] = probs[:, :act_dim]


@functools.partial(jax.jit, static_argnames=("act_dim",))
def actor_forward(obs, weights, biases, act_dim):
    """obs: [B, S] f32. weights: (4,128,128) bf16. biases: (4,1,128) f32.

    Returns probs [B, act_dim] f32 (rows sum to 1).
    """
    B, S = obs.shape
    assert S <= HIDDEN, "state_dim > 128 not supported by the packed-weight layout"

    # Only pad the feature dim up to a sublane multiple of 8 (no-op when S%8==0);
    # the padded w1 rows are zero so the result is exact.
    S_pad = _round_up(S, 8)
    if S_pad != S:
        obs = jnp.pad(obs, ((0, 0), (0, S_pad - S)))

    # Batch tile: large to amortize per-grid-step overhead, multiple of 16 for
    # bf16 sublane packing, and split into >= 2 steps for v7x megacore when the
    # batch is big enough. The ragged tail tile is handled by Pallas (OOB reads
    # are garbage but row-wise softmax keeps them isolated; OOB writes dropped).
    TB = min(2048, max(16, _round_up(B, 16)))
    if B > 16 and pl.cdiv(B, TB) < 2:
        TB = max(16, _round_up(pl.cdiv(B, 2), 16))
    grid = (pl.cdiv(B, TB),)

    kernel = functools.partial(actor_kernel, act_dim=act_dim, in_dim=S_pad)

    probs = pl.pallas_call(
        kernel,
        out_shape=jax.ShapeDtypeStruct((B, act_dim), jnp.float32),
        grid_spec=pltpu.PrefetchScalarGridSpec(
            num_scalar_prefetch=0,
            grid=grid,
            in_specs=[
                # obs: tiled over the batch grid (double-buffered by Pallas);
                # block last dim == full array dim -> legal without 128 padding.
                pl.BlockSpec((TB, S_pad), lambda i: (i, 0)),
                # weights/biases: same block every step -> VMEM-resident.
                pl.BlockSpec((4, HIDDEN, HIDDEN), lambda i: (0, 0, 0)),
                pl.BlockSpec((4, 1, HIDDEN), lambda i: (0, 0, 0)),
            ],
            # narrow output block: last dim == full array dim (act_dim).
            out_specs=pl.BlockSpec((TB, act_dim), lambda i: (i, 0)),
        ),
        compiler_params=pltpu.CompilerParams(
            dimension_semantics=("parallel",),        # megacore sharding on v7x
            vmem_limit_bytes=32 * 1024 * 1024,        # headroom for TB=2048 on v5e
        ),
    )(obs, weights, biases)

    return probs


def init_actor_params(key, state_dim, action_dim, hidden=HIDDEN):
    """PyTorch-style uniform(-1/sqrt(fan_in), 1/sqrt(fan_in)) init (unpacked)."""
    dims = [(state_dim, hidden), (hidden, hidden), (hidden, hidden), (hidden, action_dim)]
    ws, bs = [], []
    for fan_in, fan_out in dims:
        key, kw, kb = jax.random.split(key, 3)
        bound = 1.0 / jnp.sqrt(jnp.float32(fan_in))
        ws.append(jax.random.uniform(kw, (fan_in, fan_out), jnp.float32, -bound, bound))
        bs.append(jax.random.uniform(kb, (fan_out,), jnp.float32, -bound, bound))
    return ws, bs


def pack_params(ws, bs, hidden=HIDDEN):
    """Coalesce the 8 params into 2 TPU-friendly refs (zero-padded to 128)."""
    w_padded = [
        jnp.pad(w, ((0, hidden - w.shape[0]), (0, hidden - w.shape[1]))) for w in ws
    ]
    b_padded = [jnp.pad(b, (0, hidden - b.shape[0])) for b in bs]
    weights = jnp.stack(w_padded).astype(jnp.bfloat16)            # (4, 128, 128) bf16
    biases = jnp.stack(b_padded)[:, None, :].astype(jnp.float32)  # (4, 1, 128)  f32
    return weights, biases


def reference_forward(obs, ws, bs):
    """Pure-JAX reference with matching bf16 matmul operands."""
    h = obs
    for i in range(3):
        z = jnp.dot(h.astype(jnp.bfloat16), ws[i].astype(jnp.bfloat16),
                    preferred_element_type=jnp.float32) + bs[i]
        h = jnp.maximum(z, 0.0)
    logits = jnp.dot(h.astype(jnp.bfloat16), ws[3].astype(jnp.bfloat16),
                     preferred_element_type=jnp.float32) + bs[3]
    return jax.nn.softmax(logits, axis=1)


if __name__ == "__main__":
    key = jax.random.PRNGKey(0)

    batch = 2
    state_dim = 32   # np.prod(state_shape) of the flattened observation
    action_dim = 8   # np.prod(action_shape)

    key, k_obs, k_par = jax.random.split(key, 3)
    obs = jax.random.normal(k_obs, (batch, state_dim), jnp.float32)
    ws, bs = init_actor_params(k_par, state_dim, action_dim)
    weights, biases = pack_params(ws, bs)

    probs = actor_forward(obs, weights, biases, act_dim=action_dim)
    probs = jax.block_until_ready(probs)

    # sanity: match pure-JAX reference (bf16 matmuls -> ~1e-3 tolerance)
    ref = reference_forward(obs, ws, bs)
    assert probs.shape == (batch, action_dim)
    assert jnp.allclose(probs, ref, atol=3e-3, rtol=3e-3), (probs, ref)
    assert jnp.allclose(jnp.sum(probs, axis=1), 1.0, atol=1e-4)

    print("KERNEL_OK")
</pallas_src>

<mosaic_0001>
module attributes {stable_mosaic.version = 11 : i64} {
  func.func @actor_kernel(%arg0: i32, %arg1: memref<16x32xf32, #tpu.memory_space<vmem>>, %arg2: memref<4x128x128xbf16, #tpu.memory_space<vmem>>, %arg3: memref<4x1x128xf32, #tpu.memory_space<vmem>>, %arg4: memref<16x8xf32, #tpu.memory_space<vmem>>) attributes {dimension_semantics = [#tpu.dimension_semantics<parallel>], iteration_bounds = array<i64: 1>, scalar_prefetch = 0 : i64, scratch_operands = 0 : i64, tpu.core_type = #tpu.core_type<tc>, window_params = [{transform_indices = @transform_0, window_bounds = array<i64: 16, 32>}, {pipeline_mode = #tpu.pipeline_mode<synchronous>, transform_indices = @transform_1, window_bounds = array<i64: 4, 128, 128>}, {pipeline_mode = #tpu.pipeline_mode<synchronous>, transform_indices = @transform_2, window_bounds = array<i64: 4, 1, 128>}, {transform_indices = @transform_3, window_bounds = array<i64: 16, 8>}]} {
    %c0 = arith.constant 0 : index
    %c0_0 = arith.constant 0 : index
    %0 = vector.load %arg1[%c0, %c0_0] : memref<16x32xf32, #tpu.memory_space<vmem>>, vector<16x32xf32>
    %1 = arith.truncf %0 : vector<16x32xf32> to vector<16x32xbf16>
    %c0_1 = arith.constant 0 : index
    %c0_2 = arith.constant 0 : index
    %c0_3 = arith.constant 0 : index
    %2 = vector.load %arg2[%c0_1, %c0_2, %c0_3] : memref<4x128x128xbf16, #tpu.memory_space<vmem>>, vector<1x128x128xbf16>
    %3 = vector.shape_cast %2 : vector<1x128x128xbf16> to vector<128x128xbf16>
    %4 = vector.extract_strided_slice %3 {offsets = [0, 0], sizes = [32, 128], strides = [1, 1]} : vector<128x128xbf16> to vector<32x128xbf16>
    %cst = arith.constant dense<0.000000e+00> : vector<16x128xf32>
    %5 = tpu.matmul %1, %4, %cst {dimension_numbers = #tpu.dot_dimension_numbers<[1], [0], [0], [1], [0, 0, 1, 1], [], []>} : vector<16x32xbf16>, vector<32x128xbf16>, vector<16x128xf32> -> vector<16x128xf32>
    %c0_4 = arith.constant 0 : index
    %c0_5 = arith.constant 0 : index
    %c0_6 = arith.constant 0 : index
    %6 = vector.load %arg3[%c0_4, %c0_5, %c0_6] : memref<4x1x128xf32, #tpu.memory_space<vmem>>, vector<1x1x128xf32>
    %7 = vector.shape_cast %6 : vector<1x1x128xf32> to vector<1x128xf32>
    %8 = vector.broadcast %7 : vector<1x128xf32> to vector<16x128xf32>
    %9 = arith.addf %5, %8 : vector<16x128xf32>
    %cst_7 = arith.constant 0.000000e+00 : f32
    %10 = vector.broadcast %cst_7 : f32 to vector<16x128xf32>
    %11 = arith.maximumf %9, %10 : vector<16x128xf32>
    %12 = arith.truncf %11 : vector<16x128xf32> to vector<16x128xbf16>
    %c1 = arith.constant 1 : index
    %c0_8 = arith.constant 0 : index
    %c0_9 = arith.constant 0 : index
    %13 = vector.load %arg2[%c1, %c0_8, %c0_9] : memref<4x128x128xbf16, #tpu.memory_space<vmem>>, vector<1x128x128xbf16>
    %14 = vector.shape_cast %13 : vector<1x128x128xbf16> to vector<128x128xbf16>
    %cst_10 = arith.constant dense<0.000000e+00> : vector<16x128xf32>
    %15 = tpu.matmul %12, %14, %cst_10 {dimension_numbers = #tpu.dot_dimension_numbers<[1], [0], [0], [1], [0, 0, 1, 1], [], []>} : vector<16x128xbf16>, vector<128x128xbf16>, vector<16x128xf32> -> vector<16x128xf32>
    %c1_11 = arith.constant 1 : index
    %c0_12 = arith.constant 0 : index
    %c0_13 = arith.constant 0 : index
    %16 = vector.load %arg3[%c1_11, %c0_12, %c0_13] : memref<4x1x128xf32, #tpu.memory_space<vmem>>, vector<1x1x128xf32>
    %17 = vector.shape_cast %16 : vector<1x1x128xf32> to vector<1x128xf32>
    %18 = vector.broadcast %17 : vector<1x128xf32> to vector<16x128xf32>
    %19 = arith.addf %15, %18 : vector<16x128xf32>
    %cst_14 = arith.constant 0.000000e+00 : f32
    %20 = vector.broadcast %cst_14 : f32 to vector<16x128xf32>
    %21 = arith.maximumf %19, %20 : vector<16x128xf32>
    %22 = arith.truncf %21 : vector<16x128xf32> to vector<16x128xbf16>
    %c2 = arith.constant 2 : index
    %c0_15 = arith.constant 0 : index
    %c0_16 = arith.constant 0 : index
    %23 = vector.load %arg2[%c2, %c0_15, %c0_16] : memref<4x128x128xbf16, #tpu.memory_space<vmem>>, vector<1x128x128xbf16>
    %24 = vector.shape_cast %23 : vector<1x128x128xbf16> to vector<128x128xbf16>
    %cst_17 = arith.constant dense<0.000000e+00> : vector<16x128xf32>
    %25 = tpu.matmul %22, %24, %cst_17 {dimension_numbers = #tpu.dot_dimension_numbers<[1], [0], [0], [1], [0, 0, 1, 1], [], []>} : vector<16x128xbf16>, vector<128x128xbf16>, vector<16x128xf32> -> vector<16x128xf32>
    %c2_18 = arith.constant 2 : index
    %c0_19 = arith.constant 0 : index
    %c0_20 = arith.constant 0 : index
    %26 = vector.load %arg3[%c2_18, %c0_19, %c0_20] : memref<4x1x128xf32, #tpu.memory_space<vmem>>, vector<1x1x128xf32>
    %27 = vector.shape_cast %26 : vector<1x1x128xf32> to vector<1x128xf32>
    %28 = vector.broadcast %27 : vector<1x128xf32> to vector<16x128xf32>
    %29 = arith.addf %25, %28 : vector<16x128xf32>
    %cst_21 = arith.constant 0.000000e+00 : f32
    %30 = vector.broadcast %cst_21 : f32 to vector<16x128xf32>
    %31 = arith.maximumf %29, %30 : vector<16x128xf32>
    %32 = arith.truncf %31 : vector<16x128xf32> to vector<16x128xbf16>
    %c3 = arith.constant 3 : index
    %c0_22 = arith.constant 0 : index
    %c0_23 = arith.constant 0 : index
    %33 = vector.load %arg2[%c3, %c0_22, %c0_23] : memref<4x128x128xbf16, #tpu.memory_space<vmem>>, vector<1x128x128xbf16>
    %34 = vector.shape_cast %33 : vector<1x128x128xbf16> to vector<128x128xbf16>
    %cst_24 = arith.constant dense<0.000000e+00> : vector<16x128xf32>
    %35 = tpu.matmul %32, %34, %cst_24 {dimension_numbers = #tpu.dot_dimension_numbers<[1], [0], [0], [1], [0, 0, 1, 1], [], []>} : vector<16x128xbf16>, vector<128x128xbf16>, vector<16x128xf32> -> vector<16x128xf32>
    %c3_25 = arith.constant 3 : index
    %c0_26 = arith.constant 0 : index
    %c0_27 = arith.constant 0 : index
    %36 = vector.load %arg3[%c3_25, %c0_26, %c0_27] : memref<4x1x128xf32, #tpu.memory_space<vmem>>, vector<1x1x128xf32>
    %37 = vector.shape_cast %36 : vector<1x1x128xf32> to vector<1x128xf32>
    %38 = vector.broadcast %37 : vector<1x128xf32> to vector<16x128xf32>
    %39 = arith.addf %35, %38 : vector<16x128xf32>
    %40 = tpu.iota {dimensions = array<i32: 1>} : vector<16x128xi32>
    %c8_i32 = arith.constant 8 : i32
    %41 = vector.broadcast %c8_i32 : i32 to vector<16x128xi32>
    %42 = arith.cmpi slt, %40, %41 : vector<16x128xi32>
    %cst_28 = arith.constant -1.000000e+30 : f32
    %43 = vector.broadcast %cst_28 : f32 to vector<16x128xf32>
    %44 = arith.select %42, %39, %43 : vector<16x128xi1>, vector<16x128xf32>
    %cst_29 = arith.constant dense<0xFF800000> : vector<16xf32>
    %45 = vector.multi_reduction <maximumf>, %44, %cst_29 [1] : vector<16x128xf32> to vector<16xf32>
    %46 = vector.shape_cast %45 : vector<16xf32> to vector<16x1xf32>
    %47 = vector.broadcast %46 : vector<16x1xf32> to vector<16x128xf32>
    %48 = arith.subf %44, %47 : vector<16x128xf32>
    %49 = math.exp %48 : vector<16x128xf32>
    %cst_30 = arith.constant dense<0.000000e+00> : vector<16xf32>
    %50 = vector.multi_reduction <add>, %49, %cst_30 [1] : vector<16x128xf32> to vector<16xf32>
    %51 = vector.shape_cast %50 : vector<16xf32> to vector<16x1xf32>
    %52 = vector.broadcast %51 : vector<16x1xf32> to vector<16x128xf32>
    %53 = arith.divf %49, %52 : vector<16x128xf32>
    %54 = vector.extract_strided_slice %53 {offsets = [0, 0], sizes = [16, 8], strides = [1, 1]} : vector<16x128xf32> to vector<16x8xf32>
    %c0_31 = arith.constant 0 : index
    %c0_32 = arith.constant 0 : index
    %55 = vector.load %arg4[%c0_31, %c0_32] : memref<16x8xf32, #tpu.memory_space<vmem>>, vector<16x8xf32>
    tpu.vector_store %arg4[%c0_31, %c0_32], %54 {strides = array<i32>} : memref<16x8xf32, #tpu.memory_space<vmem>>, vector<16x8xf32>,
    return
  }
  func.func @transform_0(%arg0: i32) -> (i32, i32) {
    %c0_i32 = arith.constant 0 : i32
    %c0_i32_0 = arith.constant 0 : i32
    return %arg0, %c0_i32 : i32, i32
  }
  func.func @transform_1(%arg0: i32) -> (i32, i32, i32) {
    %c0_i32 = arith.constant 0 : i32
    %c0_i32_0 = arith.constant 0 : i32
    %c0_i32_1 = arith.constant 0 : i32
    %c0_i32_2 = arith.constant 0 : i32
    return %c0_i32, %c0_i32_0, %c0_i32_1 : i32, i32, i32
  }
  func.func @transform_2(%arg0: i32) -> (i32, i32, i32) {
    %c0_i32 = arith.constant 0 : i32
    %c0_i32_0 = arith.constant 0 : i32
    %c0_i32_1 = arith.constant 0 : i32
    %c0_i32_2 = arith.constant 0 : i32
    return %c0_i32, %c0_i32_0, %c0_i32_1 : i32, i32, i32
  }
  func.func @transform_3(%arg0: i32) -> (i32, i32) {
    %c0_i32 = arith.constant 0 : i32
    %c0_i32_0 = arith.constant 0 : i32
    return %arg0, %c0_i32 : i32, i32
  }
}

</mosaic_0001>

<llo_original>
// kernel: actor_forward.1
$region0: #{actor_forward.1}
  #allocation0 [shape = 'u32[]', space=smem, size = 0x4, offset = 0x4, fixed_abs, tag = 'smem constant byte address 0x4 - core index']
  #allocation1 [shape = 'u32[144,128]{1,0:T(1,128)}', space=vmem, size = 0x12000, scoped, tag = 'internal scratch']
  %s0 = inlined_call_operand.hbm [shape: f32[2,32], index: 0, kind: input, shape index: {}]
  %s1 = inlined_call_operand.hbm [shape: bf16[4,128,128], index: 1, kind: input, shape index: {}]
  %s2 = inlined_call_operand.vmem [shape: f32[4,1,128], index: 2, kind: input, shape index: {}]
  %s3 = inlined_call_operand.hbm [shape: f32[2,8], index: 3, kind: output, shape index: {}]
  %s4 = sld [smem:[#allocation0]]
  $region30: #{actor_forward.1} parent=0
    _
  %s6 = ssub.s32 1, %s4
  %s7 = scalar_select 0, %s6, %s4
  $region1: #{actor_forward.1} parent=0
    #allocation2 [shape = 'u8[8192]{0}', space=vmem, size = 0x2000, scoped, tag = 'input window, operand 0, single buffered']
    #allocation3 [shape = 's32[1]{0}', space=sflag, size = 0x4, scoped, tag = 'scoped memory for actor_forward.1']
    #allocation4 [shape = 's32[1]{0}', space=sflag, size = 0x4, scoped, tag = 'scoped memory for actor_forward.1']
    #allocation5 [shape = 'u8[131072]{0}', space=vmem, size = 0x20000, scoped, tag = 'input window, operand 1, single buffered']
    #allocation6 [shape = 's32[1]{0}', space=sflag, size = 0x4, scoped, tag = 'scoped memory for actor_forward.1']
    #allocation7 [shape = 'u8[8192]{0}', space=vmem, size = 0x2000, scoped, tag = 'output window, operand 0, single buffered']
    %8 = vsyncpa [#allocation3], 0
    %9 = vsyncpa [#allocation6], 0
    %10 = vsyncpa [#allocation4], 0
    // Predicated region
    $region2: #{actor_forward.1} parent=1 // pred_check
      _
    $region3: #{actor_forward.1} parent=1 // pred_check_branch
      %12 = sbr.rel (0) target = $region5
    $region4: #{actor_forward.1} parent=1 // pred_region
      %s14 = ssub.s32 256, 32
      %15 = vsyncadd [#allocation3], %s14
      %s16 = sshll.u32 [#allocation2], 4
      %s17 = int_to_ptr.vmem [resolvable:$true] %s16
      %22 = dma.hbm_to_vmem [thread:$0]  %s0, 32, %s17, [#allocation3], 32, 32, 2
    $region5: #{actor_forward.1} parent=1 // pred_fallthru
      _
    // Predicated region
    $region6: #{actor_forward.1} parent=1 // pred_check
      _
    $region7: #{actor_forward.1} parent=1 // pred_check_branch
      %24 = sbr.rel (0) target = $region9
    $region8: #{actor_forward.1} parent=1 // pred_region
      %s26 = ssub.s32 4096, 4096
      %27 = vsyncadd [#allocation6], %s26
      %s28 = sshll.u32 [#allocation5], 4
      %s29 = int_to_ptr.vmem [resolvable:$true] %s28
      %34 = dma.hbm_to_vmem [thread:$0]  %s1, 4096, %s29, [#allocation6], 64, 64, 4
    $region9: #{actor_forward.1} parent=1 // pred_fallthru
      _
    // Predicated region
    $region10: #{actor_forward.1} parent=1 // pred_check
      _
    $region11: #{actor_forward.1} parent=1 // pred_check_branch
      %36 = sbr.rel (0) target = $region13
    $region12: #{actor_forward.1} parent=1 // pred_region
      _
    $region13: #{actor_forward.1} parent=1 // pred_fallthru
      _
    // Predicated region
    $region14: #{actor_forward.1} parent=1 // pred_check
      _
    $region15: #{actor_forward.1} parent=1 // pred_check_branch
      %38 = sbr.rel (0) target = $region17
    $region16: #{actor_forward.1} parent=1 // pred_region
      %39 = dma.done [#allocation3], 256
    $region17: #{actor_forward.1} parent=1 // pred_fallthru
      _
    // Predicated region
    $region18: #{actor_forward.1} parent=1 // pred_check
      _
    $region19: #{actor_forward.1} parent=1 // pred_check_branch
      %41 = sbr.rel (0) target = $region21
    $region20: #{actor_forward.1} parent=1 // pred_region
      %42 = dma.done [#allocation6], 4096
    $region21: #{actor_forward.1} parent=1 // pred_fallthru
      _
    %v44 = vld [vmem:[#allocation2] sm:$0xff]
    %v45 = vld [vmem:[#allocation2 + $0x8] sm:$0xff]
    %v46 = vpack.c.bf16 %v45, %v44
    %v47 = vld [vmem:[#allocation5] sm:$0xf]
    %v48 = vld [vmem:[#allocation5 + $0x4] sm:$0xf]
    %v49 = vld [vmem:[#allocation5 + $0x8] sm:$0xf]
    %v50 = vld [vmem:[#allocation5 + $0xc] sm:$0xf]
    %v51 = vld [vmem:[%s2] sm:$0x1]
    %v53 = vlaneseq
    %v54 = vshrl.u32 %v53, 7
    %v55 = vsub.s32 0, %v54
    %v56 = vrot.slane %v51, %v55
    %v62 = vunpack.c.l.b16 %v47
    %v63 = vunpack.c.l.b16 %v48
    %v64 = vunpack.c.l.b16 %v49
    %v65 = vunpack.c.l.b16 %v50
    %v66 = vpack.c.b16 %v63, %v62
    %v67 = vpack.c.b16 %v65, %v64
    %vm70 = vcmask 261120
    %v72 = vsel %vm70, %v46, 0
    %74 = vmatprep.subr.bf16.mxu0 0
    %75 = vmatpush1.bf16.msra.mxu0 %v66
    %76 = vmatprep.subr.bf16.mxu0 0
    %77 = vmatpush1.bf16.msra.mxu0 %v67
    %78 = vmatprep.subr.bf16.mxu0 0
    %79 = vmatpush1.bf16.msra.mxu0 0
    %80 = vmatprep.subr.bf16.mxu0 0
    %81 = vmatpush1.bf16.msra.mxu0 0
    %82 = vmatprep.subr.bf16.mxu0 0
    %83 = vmatpush1.bf16.msra.mxu0 0
    %84 = vmatprep.subr.bf16.mxu0 0
    %85 = vmatpush1.bf16.msra.mxu0 0
    %86 = vmatprep.subr.bf16.mxu0 0
    %87 = vmatpush1.bf16.msra.mxu0 0
    %88 = vmatprep.subr.bf16.mxu0 0
    %89 = vmatpush1.bf16.msra.mxu0 0
    %90 = vmatprep.subr.bf16.mxu0 0
    %91 = vmatpush1.bf16.msra.mxu0 0
    %92 = vmatprep.subr.bf16.mxu0 0
    %93 = vmatpush1.bf16.msra.mxu0 0
    %94 = vmatprep.subr.bf16.mxu0 0
    %95 = vmatpush1.bf16.msra.mxu0 0
    %96 = vmatprep.subr.bf16.mxu0 0
    %97 = vmatpush1.bf16.msra.mxu0 0
    %98 = vmatprep.subr.bf16.mxu0 0
    %99 = vmatpush1.bf16.msra.mxu0 0
    %100 = vmatprep.subr.bf16.mxu0 0
    %101 = vmatpush1.bf16.msra.mxu0 0
    %102 = vmatprep.subr.bf16.mxu0 0
    %103 = vmatpush1.bf16.msra.mxu0 0
    %104 = vmatprep.subr.bf16.mxu0 0
    %105 = vmatpush1.bf16.msra.mxu0 0
    %106 = vmatprep.mubr.bf16.mxu0 0
    %107 = vmatmul.mubr.bf16.gmra.mrb[0].mxu0 %v72
    %v108 = vpop.f32.mrb[0].mxu0
    %v109 = vadd.f32 %v56, %v108
    %v110 = vpop.f32.mrb[0].mxu0
    %v111 = vpop.f32.mrb[0].mxu0
    %v112 = vadd.f32 %v56, %v111
    %v113 = vpop.f32.mrb[0].mxu0
    %114 = vdwg.mxu0
    %v115 = vmax.f32 %v109, 0.0
    %v116 = vmax.f32 %v112, 0.0
    %v117 = vpack.c.bf16 %v116, %v115
    %s118 = scalar_lea.vmem [#allocation5], 64
    %v119 = vld [vmem:[%s118] sm:$0xf]
    %v120 = vld [vmem:[%s118 + $0x4] sm:$0xf]
    %v121 = vld [vmem:[%s118 + $0x8] sm:$0xf]
    %v122 = vld [vmem:[%s118 + $0xc] sm:$0xf]
    %v123 = vld [vmem:[%s118 + $0x10] sm:$0xf]
    %v124 = vld [vmem:[%s118 + $0x14] sm:$0xf]
    %v125 = vld [vmem:[%s118 + $0x18] sm:$0xf]
    %v126 = vld [vmem:[%s118 + $0x1c] sm:$0xf]
    %v127 = vld [vmem:[%s118 + $0x20] sm:$0xf]
    %v128 = vld [vmem:[%s118 + $0x24] sm:$0xf]
    %v129 = vld [vmem:[%s118 + $0x28] sm:$0xf]
    %v130 = vld [vmem:[%s118 + $0x2c] sm:$0xf]
    %v131 = vld [vmem:[%s118 + $0x30] sm:$0xf]
    %v132 = vld [vmem:[%s118 + $0x34] sm:$0xf]
    %v133 = vld [vmem:[%s118 + $0x38] sm:$0xf]
    %v134 = vld [vmem:[%s118 + $0x3c] sm:$0xf]
    %s135 = scalar_lea.vmem %s2, 1
    %v136 = vld [vmem:[%s135] sm:$0x1]
    %v138 = vlaneseq
    %v139 = vshrl.u32 %v138, 7
    %v140 = vsub.s32 0, %v139
    %v141 = vrot.slane %v136, %v140
    %v159 = vunpack.c.l.b16 %v119
    %v160 = vunpack.c.l.b16 %v120
    %v161 = vunpack.c.l.b16 %v121
    %v162 = vunpack.c.l.b16 %v122
    %v163 = vunpack.c.l.b16 %v123
    %v164 = vunpack.c.l.b16 %v124
    %v165 = vunpack.c.l.b16 %v125
    %v166 = vunpack.c.l.b16 %v126
    %v167 = vunpack.c.l.b16 %v127
    %v168 = vunpack.c.l.b16 %v128
    %v169 = vunpack.c.l.b16 %v129
    %v170 = vunpack.c.l.b16 %v130
    %v171 = vunpack.c.l.b16 %v131
    %v172 = vunpack.c.l.b16 %v132
    %v173 = vunpack.c.l.b16 %v133
    %v174 = vunpack.c.l.b16 %v134
    %v175 = vpack.c.b16 %v160, %v159
    %v176 = vpack.c.b16 %v162, %v161
    %v177 = vpack.c.b16 %v164, %v163
    %v178 = vpack.c.b16 %v166, %v165
    %v179 = vpack.c.b16 %v168, %v167
    %v180 = vpack.c.b16 %v170, %v169
    %v181 = vpack.c.b16 %v172, %v171
    %v182 = vpack.c.b16 %v174, %v173
    %191 = vmatprep.subr.bf16.mxu0 0
    %192 = vmatpush1.bf16.msra.mxu0 %v175
    %193 = vmatprep.subr.bf16.mxu0 0
    %194 = vmatpush1.bf16.msra.mxu0 %v176
    %195 = vmatprep.subr.bf16.mxu0 0
    %196 = vmatpush1.bf16.msra.mxu0 %v177
    %197 = vmatprep.subr.bf16.mxu0 0
    %198 = vmatpush1.bf16.msra.mxu0 %v178
    %199 = vmatprep.subr.bf16.mxu0 0
    %200 = vmatpush1.bf16.msra.mxu0 %v179
    %201 = vmatprep.subr.bf16.mxu0 0
    %202 = vmatpush1.bf16.msra.mxu0 %v180
    %203 = vmatprep.subr.bf16.mxu0 0
    %204 = vmatpush1.bf16.msra.mxu0 %v181
    %205 = vmatprep.subr.bf16.mxu0 0
    %206 = vmatpush1.bf16.msra.mxu0 %v182
    %207 = vmatprep.subr.bf16.mxu0 0
    %208 = vmatpush1.bf16.msra.mxu0 0
    %209 = vmatprep.subr.bf16.mxu0 0
    %210 = vmatpush1.bf16.msra.mxu0 0
    %211 = vmatprep.subr.bf16.mxu0 0
    %212 = vmatpush1.bf16.msra.mxu0 0
    %213 = vmatprep.subr.bf16.mxu0 0
    %214 = vmatpush1.bf16.msra.mxu0 0
    %215 = vmatprep.subr.bf16.mxu0 0
    %216 = vmatpush1.bf16.msra.mxu0 0
    %217 = vmatprep.subr.bf16.mxu0 0
    %218 = vmatpush1.bf16.msra.mxu0 0
    %219 = vmatprep.subr.bf16.mxu0 0
    %220 = vmatpush1.bf16.msra.mxu0 0
    %221 = vmatprep.subr.bf16.mxu0 0
    %222 = vmatpush1.bf16.msra.mxu0 0
    %223 = vmatprep.mubr.bf16.mxu0 0
    %224 = vmatmul.mubr.bf16.gmra.mrb[0].mxu0 %v117
    %v225 = vpop.f32.mrb[0].mxu0
    %v226 = vadd.f32 %v141, %v225
    %v227 = vpop.f32.mrb[0].mxu0
    %v228 = vpop.f32.mrb[0].mxu0
    %v229 = vadd.f32 %v141, %v228
    %v230 = vpop.f32.mrb[0].mxu0
    %231 = vdwg.mxu0
    %v232 = vmax.f32 %v226, 0.0
    %v233 = vmax.f32 %v229, 0.0
    %v234 = vpack.c.bf16 %v233, %v232
    %s235 = scalar_lea.vmem [#allocation5], 128
    %v236 = vld [vmem:[%s235] sm:$0xf]
    %v237 = vld [vmem:[%s235 + $0x4] sm:$0xf]
    %v238 = vld [vmem:[%s235 + $0x8] sm:$0xf]
    %v239 = vld [vmem:[%s235 + $0xc] sm:$0xf]
    %v240 = vld [vmem:[%s235 + $0x10] sm:$0xf]
    %v241 = vld [vmem:[%s235 + $0x14] sm:$0xf]
    %v242 = vld [vmem:[%s235 + $0x18] sm:$0xf]
    %v243 = vld [vmem:[%s235 + $0x1c] sm:$0xf]
    %v244 = vld [vmem:[%s235 + $0x20] sm:$0xf]
    %v245 = vld [vmem:[%s235 + $0x24] sm:$0xf]
    %v246 = vld [vmem:[%s235 + $0x28] sm:$0xf]
    %v247 = vld [vmem:[%s235 + $0x2c] sm:$0xf]
    %v248 = vld [vmem:[%s235 + $0x30] sm:$0xf]
    %v249 = vld [vmem:[%s235 + $0x34] sm:$0xf]
    %v250 = vld [vmem:[%s235 + $0x38] sm:$0xf]
    %v251 = vld [vmem:[%s235 + $0x3c] sm:$0xf]
    %s252 = scalar_lea.vmem %s2, 2
    %v253 = vld [vmem:[%s252] sm:$0x1]
    %v255 = vlaneseq
    %v256 = vshrl.u32 %v255, 7
    %v257 = vsub.s32 0, %v256
    %v258 = vrot.slane %v253, %v257
    %v276 = vunpack.c.l.b16 %v236
    %v277 = vunpack.c.l.b16 %v237
    %v278 = vunpack.c.l.b16 %v238
    %v279 = vunpack.c.l.b16 %v239
    %v280 = vunpack.c.l.b16 %v240
    %v281 = vunpack.c.l.b16 %v241
    %v282 = vunpack.c.l.b16 %v242
    %v283 = vunpack.c.l.b16 %v243
    %v284 = vunpack.c.l.b16 %v244
    %v285 = vunpack.c.l.b16 %v245
    %v286 = vunpack.c.l.b16 %v246
    %v287 = vunpack.c.l.b16 %v247
    %v288 = vunpack.c.l.b16 %v248
    %v289 = vunpack.c.l.b16 %v249
    %v290 = vunpack.c.l.b16 %v250
    %v291 = vunpack.c.l.b16 %v251
    %v292 = vpack.c.b16 %v277, %v276
    %v293 = vpack.c.b16 %v279, %v278
    %v294 = vpack.c.b16 %v281, %v280
    %v295 = vpack.c.b16 %v283, %v282
    %v296 = vpack.c.b16 %v285, %v284
    %v297 = vpack.c.b16 %v287, %v286
    %v298 = vpack.c.b16 %v289, %v288
    %v299 = vpack.c.b16 %v291, %v290
    %308 = vmatprep.subr.bf16.mxu0 0
    %309 = vmatpush1.bf16.msra.mxu0 %v292
    %310 = vmatprep.subr.bf16.mxu0 0
    %311 = vmatpush1.bf16.msra.mxu0 %v293
    %312 = vmatprep.subr.bf16.mxu0 0
    %313 = vmatpush1.bf16.msra.mxu0 %v294
    %314 = vmatprep.subr.bf16.mxu0 0
    %315 = vmatpush1.bf16.msra.mxu0 %v295
    %316 = vmatprep.subr.bf16.mxu0 0
    %317 = vmatpush1.bf16.msra.mxu0 %v296
    %318 = vmatprep.subr.bf16.mxu0 0
    %319 = vmatpush1.bf16.msra.mxu0 %v297
    %320 = vmatprep.subr.bf16.mxu0 0
    %321 = vmatpush1.bf16.msra.mxu0 %v298
    %322 = vmatprep.subr.bf16.mxu0 0
    %323 = vmatpush1.bf16.msra.mxu0 %v299
    %324 = vmatprep.subr.bf16.mxu0 0
    %325 = vmatpush1.bf16.msra.mxu0 0
    %326 = vmatprep.subr.bf16.mxu0 0
    %327 = vmatpush1.bf16.msra.mxu0 0
    %328 = vmatprep.subr.bf16.mxu0 0
    %329 = vmatpush1.bf16.msra.mxu0 0
    %330 = vmatprep.subr.bf16.mxu0 0
    %331 = vmatpush1.bf16.msra.mxu0 0
    %332 = vmatprep.subr.bf16.mxu0 0
    %333 = vmatpush1.bf16.msra.mxu0 0
    %334 = vmatprep.subr.bf16.mxu0 0
    %335 = vmatpush1.bf16.msra.mxu0 0
    %336 = vmatprep.subr.bf16.mxu0 0
    %337 = vmatpush1.bf16.msra.mxu0 0
    %338 = vmatprep.subr.bf16.mxu0 0
    %339 = vmatpush1.bf16.msra.mxu0 0
    %340 = vmatprep.mubr.bf16.mxu0 0
    %341 = vmatmul.mubr.bf16.gmra.mrb[0].mxu0 %v234
    %v342 = vpop.f32.mrb[0].mxu0
    %v343 = vadd.f32 %v258, %v342
    %v344 = vpop.f32.mrb[0].mxu0
    %v345 = vpop.f32.mrb[0].mxu0
    %v346 = vadd.f32 %v258, %v345
    %v347 = vpop.f32.mrb[0].mxu0
    %348 = vdwg.mxu0
    %v349 = vmax.f32 %v343, 0.0
    %v350 = vmax.f32 %v346, 0.0
    %v351 = vpack.c.bf16 %v350, %v349
    %s352 = scalar_lea.vmem [#allocation5], 192
    %v353 = vld [vmem:[%s352] sm:$0xf]
    %v354 = vld [vmem:[%s352 + $0x4] sm:$0xf]
    %v355 = vld [vmem:[%s352 + $0x8] sm:$0xf]
    %v356 = vld [vmem:[%s352 + $0xc] sm:$0xf]
    %v357 = vld [vmem:[%s352 + $0x10] sm:$0xf]
    %v358 = vld [vmem:[%s352 + $0x14] sm:$0xf]
    %v359 = vld [vmem:[%s352 + $0x18] sm:$0xf]
    %v360 = vld [vmem:[%s352 + $0x1c] sm:$0xf]
    %v361 = vld [vmem:[%s352 + $0x20] sm:$0xf]
    %v362 = vld [vmem:[%s352 + $0x24] sm:$0xf]
    %v363 = vld [vmem:[%s352 + $0x28] sm:$0xf]
    %v364 = vld [vmem:[%s352 + $0x2c] sm:$0xf]
    %v365 = vld [vmem:[%s352 + $0x30] sm:$0xf]
    %v366 = vld [vmem:[%s352 + $0x34] sm:$0xf]
    %v367 = vld [vmem:[%s352 + $0x38] sm:$0xf]
    %v368 = vld [vmem:[%s352 + $0x3c] sm:$0xf]
    %s369 = scalar_lea.vmem %s2, 3
    %v370 = vld [vmem:[%s369] sm:$0x1]
    %v372 = vlaneseq
    %v373 = vshrl.u32 %v372, 7
    %v374 = vsub.s32 0, %v373
    %v375 = vrot.slane %v370, %v374
    %v393 = vunpack.c.l.b16 %v353
    %v394 = vunpack.c.l.b16 %v354
    %v395 = vunpack.c.l.b16 %v355
    %v396 = vunpack.c.l.b16 %v356
    %v397 = vunpack.c.l.b16 %v357
    %v398 = vunpack.c.l.b16 %v358
    %v399 = vunpack.c.l.b16 %v359
    %v400 = vunpack.c.l.b16 %v360
    %v401 = vunpack.c.l.b16 %v361
    %v402 = vunpack.c.l.b16 %v362
    %v403 = vunpack.c.l.b16 %v363
    %v404 = vunpack.c.l.b16 %v364
    %v405 = vunpack.c.l.b16 %v365
    %v406 = vunpack.c.l.b16 %v366
    %v407 = vunpack.c.l.b16 %v367
    %v408 = vunpack.c.l.b16 %v368
    %v409 = vpack.c.b16 %v394, %v393
    %v410 = vpack.c.b16 %v396, %v395
    %v411 = vpack.c.b16 %v398, %v397
    %v412 = vpack.c.b16 %v400, %v399
    %v413 = vpack.c.b16 %v402, %v401
    %v414 = vpack.c.b16 %v404, %v403
    %v415 = vpack.c.b16 %v406, %v405
    %v416 = vpack.c.b16 %v408, %v407
    %425 = vmatprep.subr.bf16.mxu0 0
    %426 = vmatpush1.bf16.msra.mxu0 %v409
    %427 = vmatprep.subr.bf16.mxu0 0
    %428 = vmatpush1.bf16.msra.mxu0 %v410
    %429 = vmatprep.subr.bf16.mxu0 0
    %430 = vmatpush1.bf16.msra.mxu0 %v411
    %431 = vmatprep.subr.bf16.mxu0 0
    %432 = vmatpush1.bf16.msra.mxu0 %v412
    %433 = vmatprep.subr.bf16.mxu0 0
    %434 = vmatpush1.bf16.msra.mxu0 %v413
    %435 = vmatprep.subr.bf16.mxu0 0
    %436 = vmatpush1.bf16.msra.mxu0 %v414
    %437 = vmatprep.subr.bf16.mxu0 0
    %438 = vmatpush1.bf16.msra.mxu0 %v415
    %439 = vmatprep.subr.bf16.mxu0 0
    %440 = vmatpush1.bf16.msra.mxu0 %v416
    %441 = vmatprep.subr.bf16.mxu0 0
    %442 = vmatpush1.bf16.msra.mxu0 0
    %443 = vmatprep.subr.bf16.mxu0 0
    %444 = vmatpush1.bf16.msra.mxu0 0
    %445 = vmatprep.subr.bf16.mxu0 0
    %446 = vmatpush1.bf16.msra.mxu0 0
    %447 = vmatprep.subr.bf16.mxu0 0
    %448 = vmatpush1.bf16.msra.mxu0 0
    %449 = vmatprep.subr.bf16.mxu0 0
    %450 = vmatpush1.bf16.msra.mxu0 0
    %451 = vmatprep.subr.bf16.mxu0 0
    %452 = vmatpush1.bf16.msra.mxu0 0
    %453 = vmatprep.subr.bf16.mxu0 0
    %454 = vmatpush1.bf16.msra.mxu0 0
    %455 = vmatprep.subr.bf16.mxu0 0
    %456 = vmatpush1.bf16.msra.mxu0 0
    %457 = vmatprep.mubr.bf16.mxu0 0
    %458 = vmatmul.mubr.bf16.gmra.mrb[0].mxu0 %v351
    %v459 = vpop.f32.mrb[0].mxu0
    %v460 = vadd.f32 %v375, %v459
    %v461 = vpop.f32.mrb[0].mxu0
    %v462 = vpop.f32.mrb[0].mxu0
    %v463 = vadd.f32 %v375, %v462
    %v464 = vpop.f32.mrb[0].mxu0
    %465 = vdwg.mxu0
    %v466 = vlaneseq
    %v467 = vand.u32 %v466, 127
    %vm468 = vcmp.lt.s32.totalorder %v467, 8
    %v469 = vsel %vm468, %v460, -1e+30
    %v470 = vsel %vm468, %v463, -1e+30
    %471 = vmax.xlane.f32.xlu0 %v469
    %v472 = vpop.xlane.xlu0 %471
    %473 = vmax.xlane.f32.xlu0 %v470
    %v474 = vpop.xlane.xlu0 %473
    %v475 = vsub.f32 %v469, %v472
    %v476 = vsub.f32 %v470, %v474
    %v477 = vmul.f32 %v475, 1.442695
    %v478 = vpow.pop %v477
    %v479 = vmul.f32 %v476, 1.442695
    %v480 = vpow.pop %v479
    %481 = vadd.xlane.f32.xlu0 %v478
    %v482 = vpop.xlane.xlu0 %481
    %483 = vadd.xlane.f32.xlu0 %v480
    %v484 = vpop.xlane.xlu0 %483
    %v485 = vrcp.pop %v482
    %v486 = vmul.f32 %v478, %v485
    %v487 = vrcp.pop %v484
    %v488 = vmul.f32 %v480, %v487
    %vm489 = vcmask 64512
    %490 = vst.msk [vmem:[#allocation7] sm:$0xff] %vm489, %v486
    %491 = vst.msk [vmem:[#allocation7 + $0x8] sm:$0xff] %vm489, %v488
    // Predicated region
    $region22: #{actor_forward.1} parent=1 // pred_check
      _
    $region23: #{actor_forward.1} parent=1 // pred_check_branch
      %493 = sbr.rel (0) target = $region25
    $region24: #{actor_forward.1} parent=1 // pred_region
      %s495 = ssub.s32 256, 32
      %496 = vsyncadd [#allocation4], %s495
      %s497 = sshll.u32 [#allocation7], 4
      %s498 = int_to_ptr.vmem [resolvable:$true] %s497
      %503 = dma.vmem_to_hbm [thread:$0]  %s498, 32, %s3, [#allocation4], 32, 32, 2
    $region25: #{actor_forward.1} parent=1 // pred_fallthru
      _
    // Predicated region
    $region26: #{actor_forward.1} parent=1 // pred_check
      _
    $region27: #{actor_forward.1} parent=1 // pred_check_branch
      %505 = sbr.rel (0) target = $region29
    $region28: #{actor_forward.1} parent=1 // pred_region
      %506 = dma.done [#allocation4], 256
    $region29: #{actor_forward.1} parent=1 // pred_fallthru
      _
    %507 = vsyncpa [#allocation3], 1
    %508 = vsyncpa [#allocation6], 1
    %509 = vsyncpa [#allocation4], 1

</llo_original>
